<compile_context>
chip_gen: v7x
topology: tpu7x:2x2x1
jax: 0.10.0
libtpu: 0.0.40
codegen_flags: <defaults>
</compile_context>

<pallas_src>
import functools

import jax
import jax.numpy as jnp
from jax.experimental import pallas as pl
from jax.experimental.pallas import tpu as pltpu


def _round_up(x, m):
    return (x + m - 1) // m * m


def _queue_tiling(queue_size):
    """Return (q_pad, tn): once-at-init padded queue rows and the queue tile size.

    q_pad is always an exact multiple of tn, so grid blocks never read past the
    (zero-)padded queue buffer and no garbage ever enters the MXU.
    """
    if queue_size <= 2 * 2560:
        q_pad = _round_up(queue_size, 512)
        tn = q_pad // 2            # multiple of 256; 2 parallel steps (one per v7x TC)
    else:
        q_pad = _round_up(queue_size, 2560)
        tn = 2560
    return q_pad, tn


def _unlabeled_matching_kernel(f_ref, q_ref, o_ref):
    """One (tm, tn) tile of scores = features @ queue.T.

    f_ref: (tm, feat_len) bf16 block of features
    q_ref: (tn, feat_len) bf16 block of queue rows (contract over feature dim)
    o_ref: (tm, tn)       output tile (f32), partial tiles masked by Pallas
    """
    o_ref[...] = jax.lax.dot_general(
        f_ref[...], q_ref[...],
        dimension_numbers=(((1,), (1,)), ((), ())),   # (tm,F) x (tn,F)^T -> (tm,tn)
        preferred_element_type=jnp.float32,
    ).astype(o_ref.dtype)


@functools.partial(jax.jit, static_argnames=("queue_size",))
def unlabeled_matching_scores(features, queue_padded_bf16, *, queue_size):
    """scores[N, queue_size] = features[N, F] @ queue[queue_size, F].T

    queue_padded_bf16 must be the pre-cast/pre-padded (q_pad, F) bf16 buffer
    produced by UnlabeledMatchingLayer.set_queue (q_pad from _queue_tiling).
    """
    n, feat_len = features.shape
    q_pad_expected, tn = _queue_tiling(queue_size)
    q_pad, feat_len_q = queue_padded_bf16.shape
    assert feat_len == feat_len_q
    assert q_pad == q_pad_expected

    # Per-call cast of the (tiny) activation tensor only; queue was cast at init.
    f = features.astype(jnp.bfloat16)

    # Row tiling: OIM proposal counts are small -> one full-extent row tile
    # (block dim equal to the array dim satisfies the layout rule). Fall back to
    # 256-row tiles for unexpectedly large N; the last partial row tile's output
    # stores are masked by Pallas.
    if n <= 512:
        tm, num_i = n, 1
    else:
        tm, num_i = 256, pl.cdiv(n, 256)

    # Grid over the *real* queue extent; last tile's output columns are masked,
    # and the rows it reads beyond queue_size are zeros from the init-time pad.
    num_j = pl.cdiv(queue_size, tn)

    out_dtype = features.dtype
    cost = pl.CostEstimate(
        flops=2 * n * num_j * tn * feat_len,
        transcendentals=0,
        bytes_accessed=(n * feat_len * 2                 # features (bf16)
                        + num_j * tn * feat_len * 2      # queue tiles read (bf16)
                        + n * queue_size * jnp.dtype(out_dtype).itemsize),
    )

    return pl.pallas_call(
        _unlabeled_matching_kernel,
        out_shape=jax.ShapeDtypeStruct((n, queue_size), out_dtype),
        grid_spec=pltpu.PrefetchScalarGridSpec(
            num_scalar_prefetch=0,
            grid=(num_j, num_i),
            in_specs=[
                pl.BlockSpec((tm, feat_len), lambda j, i: (i, 0)),   # features
                pl.BlockSpec((tn, feat_len), lambda j, i: (j, 0)),   # queue tile
            ],
            out_specs=pl.BlockSpec((tm, tn), lambda j, i: (i, j)),
        ),
        compiler_params=pltpu.CompilerParams(
            dimension_semantics=("parallel", "parallel"),
        ),
        cost_estimate=cost,
    )(f, queue_padded_bf16)


class UnlabeledMatchingLayer:
    """JAX/Pallas port of the OIM unlabeled matching layer (forward only)."""

    def __init__(self, queue_size=5000, feat_len=256, init_key=None):
        self.queue_size = queue_size
        self.feat_len = feat_len
        self.tail = jnp.array(0, jnp.int32)
        # The PyTorch module registers a zeros buffer; optionally fill it so the
        # kernel produces non-trivial outputs for checking.
        if init_key is None:
            queue = jnp.zeros((queue_size, feat_len), jnp.float32)
        else:
            queue = jax.random.normal(init_key, (queue_size, feat_len), jnp.float32)
        self.set_queue(queue)

    def set_queue(self, queue):
        """Store the canonical f32 queue and its pre-cast/pre-padded bf16 copy.

        Call this whenever the queue buffer is updated so the padded bf16 copy
        (what the kernel actually reads) stays in sync.
        """
        assert queue.shape == (self.queue_size, self.feat_len)
        self.queue = queue
        q_pad, _ = _queue_tiling(self.queue_size)
        qb = queue.astype(jnp.bfloat16)
        if q_pad != self.queue_size:
            qb = jnp.pad(qb, ((0, q_pad - self.queue_size), (0, 0)))
        self._queue_bf16 = qb

    def __call__(self, features, pid_labels):
        # TODO(synk): the circular queue update (queue[tail] = features[i] for
        # pid_labels[i] == -1, tail wrap-around) lives in the autograd backward
        # of the original Function; it is a training-time stateful side effect
        # and is not part of this forward kernel.
        del pid_labels  # forward pass does not use labels
        return unlabeled_matching_scores(
            features, self._queue_bf16, queue_size=self.queue_size)


if __name__ == "__main__":
    key = jax.random.PRNGKey(0)
    k1, k2, k3, k4 = jax.random.split(key, 4)

    # --- case 1: small, deliberately tile-misaligned shapes (exercises masking) ---
    n, feat_len, queue_size = 10, 96, 200
    features = jax.random.normal(k1, (n, feat_len), jnp.float32)
    pid_labels = jnp.full((n,), -1, jnp.int32)
    layer = UnlabeledMatchingLayer(queue_size=queue_size, feat_len=feat_len,
                                   init_key=k2)
    scores = jax.block_until_ready(layer(features, pid_labels))
    assert scores.shape == (n, queue_size)
    # reference: f32 matmul on bf16-rounded inputs (kernel accumulates in f32)
    ref = (features.astype(jnp.bfloat16).astype(jnp.float32)
           @ layer.queue.astype(jnp.bfloat16).astype(jnp.float32).T)
    assert jnp.allclose(scores, ref, atol=2e-2, rtol=2e-2)

    # --- case 2: production defaults (queue_size=5000 -> 2 queue tiles of 2560) ---
    n2, feat_len2, queue_size2 = 64, 256, 5000
    features2 = jax.random.normal(k3, (n2, feat_len2), jnp.float32)
    pid_labels2 = jnp.full((n2,), -1, jnp.int32)
    layer2 = UnlabeledMatchingLayer(queue_size=queue_size2, feat_len=feat_len2,
                                    init_key=k4)
    scores2 = jax.block_until_ready(layer2(features2, pid_labels2))
    assert scores2.shape == (n2, queue_size2)
    ref2 = (features2.astype(jnp.bfloat16).astype(jnp.float32)
            @ layer2.queue.astype(jnp.bfloat16).astype(jnp.float32).T)
    assert jnp.allclose(scores2, ref2, atol=2e-2, rtol=2e-2)

    print("KERNEL_OK")
</pallas_src>

<mosaic_0001>
module attributes {stable_mosaic.version = 11 : i64} {
  func.func @_unlabeled_matching_kernel(%arg0: i32, %arg1: i32, %arg2: memref<10x96xbf16, #tpu.memory_space<vmem>>, %arg3: memref<256x96xbf16, #tpu.memory_space<vmem>>, %arg4: memref<10x256xf32, #tpu.memory_space<vmem>>) attributes {dimension_semantics = [#tpu.dimension_semantics<parallel>, #tpu.dimension_semantics<parallel>], iteration_bounds = array<i64: 1, 1>, scalar_prefetch = 0 : i64, scratch_operands = 0 : i64, tpu.core_type = #tpu.core_type<tc>, window_params = [{transform_indices = @transform_0, window_bounds = array<i64: 10, 96>}, {transform_indices = @transform_1, window_bounds = array<i64: 256, 96>}, {transform_indices = @transform_2, window_bounds = array<i64: 10, 256>}]} {
    %c0 = arith.constant 0 : index
    %c0_0 = arith.constant 0 : index
    %0 = vector.load %arg2[%c0, %c0_0] : memref<10x96xbf16, #tpu.memory_space<vmem>>, vector<10x96xbf16>
    %c0_1 = arith.constant 0 : index
    %c0_2 = arith.constant 0 : index
    %1 = vector.load %arg3[%c0_1, %c0_2] : memref<256x96xbf16, #tpu.memory_space<vmem>>, vector<256x96xbf16>
    %cst = arith.constant dense<0.000000e+00> : vector<10x256xf32>
    %2 = tpu.matmul %0, %1, %cst {dimension_numbers = #tpu.dot_dimension_numbers<[1], [1], [0], [0], [0, 0, 1, 0], [], []>} : vector<10x96xbf16>, vector<256x96xbf16>, vector<10x256xf32> -> vector<10x256xf32>
    %c0_3 = arith.constant 0 : index
    %c0_4 = arith.constant 0 : index
    %3 = vector.load %arg4[%c0_3, %c0_4] : memref<10x256xf32, #tpu.memory_space<vmem>>, vector<10x256xf32>
    tpu.vector_store %arg4[%c0_3, %c0_4], %2 {strides = array<i32>} : memref<10x256xf32, #tpu.memory_space<vmem>>, vector<10x256xf32>,
    return
  }
  func.func @transform_0(%arg0: i32, %arg1: i32) -> (i32, i32) {
    %c0_i32 = arith.constant 0 : i32
    %c0_i32_0 = arith.constant 0 : i32
    return %arg1, %c0_i32 : i32, i32
  }
  func.func @transform_1(%arg0: i32, %arg1: i32) -> (i32, i32) {
    %c0_i32 = arith.constant 0 : i32
    %c0_i32_0 = arith.constant 0 : i32
    return %arg0, %c0_i32 : i32, i32
  }
  func.func @transform_2(%arg0: i32, %arg1: i32) -> (i32, i32) {
    %c0_i32 = arith.constant 0 : i32
    return %arg1, %arg0 : i32, i32
  }
}

</mosaic_0001>

<llo_original>
// kernel: unlabeled_matching_scores.1
$region0: #{unlabeled_matching_scores.1}
  #allocation0 [shape = 'u32[]', space=smem, size = 0x4, offset = 0x4, fixed_abs, tag = 'smem constant byte address 0x4 - core index']
  #allocation1 [shape = 'u32[144,128]{1,0:T(1,128)}', space=vmem, size = 0x12000, scoped, tag = 'internal scratch']
  %s0 = inlined_call_operand.vmem [shape: bf16[10,96], index: 0, kind: input, shape index: {}]
  %s1 = inlined_call_operand.vmem [shape: bf16[512,96], index: 1, kind: input, shape index: {}]
  %s2 = inlined_call_operand.hbm [shape: f32[10,200], index: 2, kind: output, shape index: {}]
  %s3 = sld [smem:[#allocation0]]
  $region18: #{unlabeled_matching_scores.1} parent=0
    _
  %s5 = ssub.s32 1, %s3
  %s6 = scalar_select 0, %s5, %s3
  $region1: #{unlabeled_matching_scores.1} parent=0
    #allocation2 [shape = 'u8[16384]{0}', space=vmem, size = 0x4000, scoped, tag = 'output window, operand 0, single buffered']
    #allocation3 [shape = 's32[1]{0}', space=sflag, size = 0x4, scoped, tag = 'scoped memory for unlabeled_matching_scores.1']
    %7 = vsyncpa [#allocation3], 0
    // Predicated region
    $region2: #{unlabeled_matching_scores.1} parent=1 // pred_check
      _
    $region3: #{unlabeled_matching_scores.1} parent=1 // pred_check_branch
      %9 = sbr.rel (0) target = $region5
    $region4: #{unlabeled_matching_scores.1} parent=1 // pred_region
      _
    $region5: #{unlabeled_matching_scores.1} parent=1 // pred_fallthru
      _
    // Predicated region
    $region6: #{unlabeled_matching_scores.1} parent=1 // pred_check
      _
    $region7: #{unlabeled_matching_scores.1} parent=1 // pred_check_branch
      %11 = sbr.rel (0) target = $region9
    $region8: #{unlabeled_matching_scores.1} parent=1 // pred_region
      _
    $region9: #{unlabeled_matching_scores.1} parent=1 // pred_fallthru
      _
    %v13 = vld [vmem:[%s0] sm:$0xf]
    %v14 = vld [vmem:[%s0 + $0x4] sm:$0x1]
    %v15 = vld [vmem:[%s1] sm:$0xf]
    %v16 = vld [vmem:[%s1 + $0x4] sm:$0xf]
    %v17 = vld [vmem:[%s1 + $0x8] sm:$0xf]
    %v18 = vld [vmem:[%s1 + $0xc] sm:$0xf]
    %v19 = vld [vmem:[%s1 + $0x10] sm:$0xf]
    %v20 = vld [vmem:[%s1 + $0x14] sm:$0xf]
    %v21 = vld [vmem:[%s1 + $0x18] sm:$0xf]
    %v22 = vld [vmem:[%s1 + $0x1c] sm:$0xf]
    %v23 = vld [vmem:[%s1 + $0x20] sm:$0xf]
    %v24 = vld [vmem:[%s1 + $0x24] sm:$0xf]
    %v25 = vld [vmem:[%s1 + $0x28] sm:$0xf]
    %v26 = vld [vmem:[%s1 + $0x2c] sm:$0xf]
    %v27 = vld [vmem:[%s1 + $0x30] sm:$0xf]
    %v28 = vld [vmem:[%s1 + $0x34] sm:$0xf]
    %v29 = vld [vmem:[%s1 + $0x38] sm:$0xf]
    %v30 = vld [vmem:[%s1 + $0x3c] sm:$0xf]
    %v31 = vld [vmem:[%s1 + $0x40] sm:$0xf]
    %v32 = vld [vmem:[%s1 + $0x44] sm:$0xf]
    %v33 = vld [vmem:[%s1 + $0x48] sm:$0xf]
    %v34 = vld [vmem:[%s1 + $0x4c] sm:$0xf]
    %v35 = vld [vmem:[%s1 + $0x50] sm:$0xf]
    %v36 = vld [vmem:[%s1 + $0x54] sm:$0xf]
    %v37 = vld [vmem:[%s1 + $0x58] sm:$0xf]
    %v38 = vld [vmem:[%s1 + $0x5c] sm:$0xf]
    %v39 = vld [vmem:[%s1 + $0x60] sm:$0xf]
    %v40 = vld [vmem:[%s1 + $0x64] sm:$0xf]
    %v41 = vld [vmem:[%s1 + $0x68] sm:$0xf]
    %v42 = vld [vmem:[%s1 + $0x6c] sm:$0xf]
    %v43 = vld [vmem:[%s1 + $0x70] sm:$0xf]
    %v44 = vld [vmem:[%s1 + $0x74] sm:$0xf]
    %v45 = vld [vmem:[%s1 + $0x78] sm:$0xf]
    %v46 = vld [vmem:[%s1 + $0x7c] sm:$0xf]
    %v49 = vunpack.c.l.b16 %v13
    %v50 = vunpack.c.l.b16 %v14
    %v51 = vpack.c.b16 %v50, %v49
    %v84 = vunpack.c.l.b16 %v15
    %v85 = vunpack.c.l.b16 %v16
    %v86 = vunpack.c.l.b16 %v17
    %v87 = vunpack.c.l.b16 %v18
    %v88 = vunpack.c.l.b16 %v19
    %v89 = vunpack.c.l.b16 %v20
    %v90 = vunpack.c.l.b16 %v21
    %v91 = vunpack.c.l.b16 %v22
    %v92 = vunpack.c.l.b16 %v23
    %v93 = vunpack.c.l.b16 %v24
    %v94 = vunpack.c.l.b16 %v25
    %v95 = vunpack.c.l.b16 %v26
    %v96 = vunpack.c.l.b16 %v27
    %v97 = vunpack.c.l.b16 %v28
    %v98 = vunpack.c.l.b16 %v29
    %v99 = vunpack.c.l.b16 %v30
    %v100 = vunpack.c.l.b16 %v31
    %v101 = vunpack.c.l.b16 %v32
    %v102 = vunpack.c.l.b16 %v33
    %v103 = vunpack.c.l.b16 %v34
    %v104 = vunpack.c.l.b16 %v35
    %v105 = vunpack.c.l.b16 %v36
    %v106 = vunpack.c.l.b16 %v37
    %v107 = vunpack.c.l.b16 %v38
    %v108 = vunpack.c.l.b16 %v39
    %v109 = vunpack.c.l.b16 %v40
    %v110 = vunpack.c.l.b16 %v41
    %v111 = vunpack.c.l.b16 %v42
    %v112 = vunpack.c.l.b16 %v43
    %v113 = vunpack.c.l.b16 %v44
    %v114 = vunpack.c.l.b16 %v45
    %v115 = vunpack.c.l.b16 %v46
    %v116 = vpack.c.b16 %v85, %v84
    %v117 = vpack.c.b16 %v87, %v86
    %v118 = vpack.c.b16 %v89, %v88
    %v119 = vpack.c.b16 %v91, %v90
    %v120 = vpack.c.b16 %v93, %v92
    %v121 = vpack.c.b16 %v95, %v94
    %v122 = vpack.c.b16 %v97, %v96
    %v123 = vpack.c.b16 %v99, %v98
    %v124 = vpack.c.b16 %v101, %v100
    %v125 = vpack.c.b16 %v103, %v102
    %v126 = vpack.c.b16 %v105, %v104
    %v127 = vpack.c.b16 %v107, %v106
    %v128 = vpack.c.b16 %v109, %v108
    %v129 = vpack.c.b16 %v111, %v110
    %v130 = vpack.c.b16 %v113, %v112
    %v131 = vpack.c.b16 %v115, %v114
    %vm132 = vcmask 785408
    %v134 = vsel %vm132, %v51, 0
    %v137 = vsel %vm132, %v116, 0
    %v140 = vsel %vm132, %v117, 0
    %v143 = vsel %vm132, %v118, 0
    %v146 = vsel %vm132, %v119, 0
    %v149 = vsel %vm132, %v120, 0
    %v152 = vsel %vm132, %v121, 0
    %v155 = vsel %vm132, %v122, 0
    %v158 = vsel %vm132, %v123, 0
    %v161 = vsel %vm132, %v124, 0
    %v164 = vsel %vm132, %v125, 0
    %v167 = vsel %vm132, %v126, 0
    %v170 = vsel %vm132, %v127, 0
    %v173 = vsel %vm132, %v128, 0
    %v176 = vsel %vm132, %v129, 0
    %v179 = vsel %vm132, %v130, 0
    %v182 = vsel %vm132, %v131, 0
    %184 = vmatprep.subr.bf16.mxu0 0
    %185 = vmatpush1.bf16.xpose.msra.mxu0 %v137
    %186 = vmatprep.subr.bf16.mxu0 0
    %187 = vmatpush1.bf16.xpose.msra.mxu0 %v140
    %188 = vmatprep.subr.bf16.mxu0 0
    %189 = vmatpush1.bf16.xpose.msra.mxu0 %v143
    %190 = vmatprep.subr.bf16.mxu0 0
    %191 = vmatpush1.bf16.xpose.msra.mxu0 %v146
    %192 = vmatprep.subr.bf16.mxu0 0
    %193 = vmatpush1.bf16.xpose.msra.mxu0 %v149
    %194 = vmatprep.subr.bf16.mxu0 0
    %195 = vmatpush1.bf16.xpose.msra.mxu0 %v152
    %196 = vmatprep.subr.bf16.mxu0 0
    %197 = vmatpush1.bf16.xpose.msra.mxu0 %v155
    %198 = vmatprep.subr.bf16.mxu0 0
    %199 = vmatpush1.bf16.xpose.msra.mxu0 %v158
    %200 = vmatprep.subr.bf16.mxu0 0
    %201 = vmatpush1.bf16.xpose.msra.mxu0 %v161
    %202 = vmatprep.subr.bf16.mxu0 0
    %203 = vmatpush1.bf16.xpose.msra.mxu0 %v164
    %204 = vmatprep.subr.bf16.mxu0 0
    %205 = vmatpush1.bf16.xpose.msra.mxu0 %v167
    %206 = vmatprep.subr.bf16.mxu0 0
    %207 = vmatpush1.bf16.xpose.msra.mxu0 %v170
    %208 = vmatprep.subr.bf16.mxu0 0
    %209 = vmatpush1.bf16.xpose.msra.mxu0 %v173
    %210 = vmatprep.subr.bf16.mxu0 0
    %211 = vmatpush1.bf16.xpose.msra.mxu0 %v176
    %212 = vmatprep.subr.bf16.mxu0 0
    %213 = vmatpush1.bf16.xpose.msra.mxu0 %v179
    %214 = vmatprep.subr.bf16.mxu0 0
    %215 = vmatpush1.bf16.xpose.msra.mxu0 %v182
    %216 = vmatprep.mubr.bf16.mxu0 0
    %217 = vmatmul.mubr.bf16.gmra.mrb[0].mxu0 %v134
    %v218 = vpop.f32.mrb[0].mxu0
    %v219 = vadd.f32 0.0, %v218
    %v220 = vpop.f32.mrb[0].mxu0
    %v221 = vadd.f32 0.0, %v220
    %v222 = vpop.f32.mrb[0].mxu0
    %v223 = vadd.f32 0.0, %v222
    %v224 = vpop.f32.mrb[0].mxu0
    %v225 = vadd.f32 0.0, %v224
    %226 = vdwg.mxu0
    %227 = vst [vmem:[#allocation2] sm:$0xff] %v219
    %228 = vst [vmem:[#allocation2 + $0x8] sm:$0xff] %v221
    %229 = vst [vmem:[#allocation2 + $0x10] sm:$0x3] %v223
    %230 = vst [vmem:[#allocation2 + $0x18] sm:$0x3] %v225
    // Predicated region
    $region10: #{unlabeled_matching_scores.1} parent=1 // pred_check
      _
    $region11: #{unlabeled_matching_scores.1} parent=1 // pred_check_branch
      %232 = sbr.rel (0) target = $region13
    $region12: #{unlabeled_matching_scores.1} parent=1 // pred_region
      %s234 = ssub.s32 512, 512
      %235 = vsyncadd [#allocation3], %s234
      %s236 = sshll.u32 [#allocation2], 4
      %s237 = int_to_ptr.vmem [resolvable:$true] %s236
      %242 = dma.vmem_to_hbm [thread:$0]  %s237, 512, %s2, [#allocation3], 256, 256, 16
    $region13: #{unlabeled_matching_scores.1} parent=1 // pred_fallthru
      _
    // Predicated region
    $region14: #{unlabeled_matching_scores.1} parent=1 // pred_check
      _
    $region15: #{unlabeled_matching_scores.1} parent=1 // pred_check_branch
      %244 = sbr.rel (0) target = $region17
    $region16: #{unlabeled_matching_scores.1} parent=1 // pred_region
      %245 = dma.done [#allocation3], 512
    $region17: #{unlabeled_matching_scores.1} parent=1 // pred_fallthru
      _
    %246 = vsyncpa [#allocation3], 1

</llo_original>
